<compile_context>
chip_gen: v5e
topology: v5e:2x2
jax: 0.10.0
libtpu: 0.0.40
codegen_flags: <defaults>
</compile_context>

<pallas_src>
import jax
import jax.numpy as jnp
from jax import lax
from jax.experimental import pallas as pl
from jax.experimental.pallas import tpu as pltpu


def bert_pool_kernel(x_ref, w_ref, b_ref, o_ref):
    # x_ref: (B, F_in)     resident CLS rows (constant block index across grid)
    # w_ref: (F_in, TN)    MXU-native column tile of the pre-transposed weight
    # b_ref: (1, TN)       bias tile, f32
    # o_ref: (B, TN)
    x = x_ref[...]
    w = w_ref[...]
    if x.dtype != w.dtype:
        x = x.astype(w.dtype)  # tiny (B, F) VPU cast; keeps the MXU in bf16 when streaming bf16
    y = lax.dot_general(
        x, w,
        dimension_numbers=(((1,), (0,)), ((), ())),   # MXU-native: no transpose needed
        preferred_element_type=jnp.float32,
    )
    y = y + b_ref[...].astype(jnp.float32)            # f32 bias + f32 tanh epilogue
    o_ref[...] = jnp.tanh(y).astype(o_ref.dtype)


def _round_up(x, m):
    return (x + m - 1) // m * m


def _pick_tile_n(f_out_pad):
    """Lane-aligned output-feature tile; prefer >= 4 grid steps for pipeline depth."""
    candidates = [t for t in (512, 256, 128) if f_out_pad % t == 0]  # 128 always divides
    for t in candidates:
        if f_out_pad // t >= 4:
            return t
    return candidates[-1]  # small F: smallest aligned tile -> most grid steps


def _vmem_limit_bytes(working_set_bytes):
    """~80% of physical VMEM cap (headroom for compiler scratch), never less than 16 MiB."""
    try:
        cap = int(getattr(pltpu.get_tpu_info(), "vmem_capacity_bytes", 0)) or (64 << 20)
    except Exception:
        cap = 64 << 20
    budget = (cap * 4) // 5
    want = working_set_bytes * 3 // 2 + (2 << 20)
    return int(max(min(want, budget), 16 << 20))


def _dim_semantics_candidates():
    cands = []
    core_par = getattr(pltpu, "CORE_PARALLEL", None)
    if core_par is not None:
        cands.append(core_par)          # shards the weight stream across both TCs (v7x)
    cands.extend(["parallel", "arbitrary"])
    return cands


def prepare_bert_pool_params(weight, bias, *, param_dtype=jnp.bfloat16):
    """One-time (parameter-load) prep, amortized across forward calls.

    * transpose torch-layout (F_out, F_in) -> MXU-native (F_in, F_out)
    * pad F_out up to a multiple of 128 (keeps the weight stream pipelined)
    * cast the streamed weight to `param_dtype` (bf16 default); bias stays f32
    """
    fo, fi = weight.shape
    f_pad = _round_up(fo, 128)
    w_t = jnp.asarray(weight).T.astype(param_dtype)                # (F_in, F_out)
    b_row = jnp.asarray(bias).astype(jnp.float32).reshape(1, fo)   # (1, F_out)
    if f_pad != fo:
        w_t = jnp.pad(w_t, ((0, 0), (0, f_pad - fo)))
        b_row = jnp.pad(b_row, ((0, 0), (0, f_pad - fo)))
    return w_t, b_row


def bert_pool(inputs, w_t, bias_row, *, tile_n=None):
    """inputs: (B, S, F); w_t: (F, F_pad) prepared weight; bias_row: (1, F_pad) f32."""
    B, S, F = inputs.shape
    Fi, F_pad = w_t.shape
    assert Fi == F, "weight F_in must match the input feature size"
    assert bias_row.shape == (1, F_pad) and F_pad % 128 == 0 and F_pad >= F

    # Contiguous CLS slab: one small contiguous DMA, resident across the grid.
    x = inputs[:, 0, :]

    if tile_n is None:
        tile_n = _pick_tile_n(F_pad)
    assert F_pad % tile_n == 0 and tile_n % 128 == 0
    grid = (F_pad // tile_n,)

    out_dtype = inputs.dtype
    w_is = jnp.dtype(w_t.dtype).itemsize
    x_is = jnp.dtype(x.dtype).itemsize
    o_is = jnp.dtype(out_dtype).itemsize

    # Double-buffered working set (weight stream dominates).
    working = (
        2 * F * tile_n * w_is      # streamed weight tiles
        + 2 * B * F * x_is         # resident CLS slab
        + 2 * B * tile_n * o_is    # output tiles
        + 2 * tile_n * 4           # bias tiles
    )
    vmem_limit = _vmem_limit_bytes(working)

    cost = pl.CostEstimate(
        flops=2 * B * F * F_pad,
        transcendentals=B * F_pad,
        bytes_accessed=F * F_pad * w_is + B * F * x_is + B * F_pad * o_is + F_pad * 4,
    )

    def build(dim_sem):
        return pl.pallas_call(
            bert_pool_kernel,
            out_shape=jax.ShapeDtypeStruct((B, F_pad), out_dtype),
            grid_spec=pltpu.PrefetchScalarGridSpec(
                num_scalar_prefetch=0,
                grid=grid,
                in_specs=[
                    pl.BlockSpec((B, F), lambda j: (0, 0)),       # resident CLS slab
                    pl.BlockSpec((F, tile_n), lambda j: (0, j)),  # streamed weight column tile
                    pl.BlockSpec((1, tile_n), lambda j: (0, j)),  # bias tile (f32)
                ],
                out_specs=pl.BlockSpec((B, tile_n), lambda j: (0, j)),
            ),
            compiler_params=pltpu.CompilerParams(
                dimension_semantics=(dim_sem,),
                vmem_limit_bytes=vmem_limit,
            ),
            cost_estimate=cost,
        )

    out_pad = None
    last_err = None
    for dim_sem in _dim_semantics_candidates():
        try:
            out_pad = build(dim_sem)(x, w_t, bias_row)
            break
        except Exception as e:  # fall back if CORE_PARALLEL is unsupported on this part
            last_err = e
            out_pad = None
    if out_pad is None:
        raise last_err

    return out_pad[:, :F] if F_pad != F else out_pad


if __name__ == "__main__":
    key = jax.random.PRNGKey(0)
    B, S, F = 2, 8, 32
    k_x, k_w, k_b = jax.random.split(key, 3)

    inputs = jax.random.normal(k_x, (B, S, F), dtype=jnp.float32)
    # torch nn.Linear conventions: weight (F_out, F_in), bias (F,)
    weight = jax.random.normal(k_w, (F, F), dtype=jnp.float32) * 0.1
    bias = jax.random.normal(k_b, (F,), dtype=jnp.float32) * 0.1

    ref = jnp.tanh(inputs[:, 0, :] @ weight.T + bias)

    # f32-streamed path: matches the PyTorch reference to tight tolerance.
    w_f32, b_f32 = prepare_bert_pool_params(weight, bias, param_dtype=jnp.float32)
    out_f32 = jax.block_until_ready(bert_pool(inputs, w_f32, b_f32))
    assert out_f32.shape == (B, F)
    assert jnp.allclose(out_f32, ref, atol=1e-5, rtol=1e-5)

    # Default bf16-streamed path (f32 accumulate, f32 bias/tanh, f32 output):
    # ~2x fewer HBM bytes on the dominant weight stream.
    w_bf16, b_row = prepare_bert_pool_params(weight, bias)
    out_bf16 = jax.block_until_ready(bert_pool(inputs, w_bf16, b_row))
    ref_bf16 = jnp.tanh(
        inputs[:, 0, :].astype(jnp.bfloat16).astype(jnp.float32)
        @ weight.astype(jnp.bfloat16).astype(jnp.float32).T
        + bias
    )
    assert out_bf16.shape == (B, F)
    assert out_bf16.dtype == inputs.dtype
    assert jnp.allclose(out_bf16, ref_bf16, atol=2e-2, rtol=2e-2)

    print("KERNEL_OK")
</pallas_src>

<mosaic_0001>
module attributes {stable_mosaic.version = 11 : i64} {
  func.func @bert_pool_kernel(%arg0: i32, %arg1: memref<2x32xf32, #tpu.memory_space<vmem>>, %arg2: memref<32x128xf32, #tpu.memory_space<vmem>>, %arg3: memref<1x128xf32, #tpu.memory_space<vmem>>, %arg4: memref<2x128xf32, #tpu.memory_space<vmem>>) attributes {dimension_semantics = [#tpu.dimension_semantics<core_parallel>], iteration_bounds = array<i64: 1>, scalar_prefetch = 0 : i64, scratch_operands = 0 : i64, tpu.core_type = #tpu.core_type<tc>, window_params = [{pipeline_mode = #tpu.pipeline_mode<synchronous>, transform_indices = @transform_0, window_bounds = array<i64: 2, 32>}, {transform_indices = @transform_1, window_bounds = array<i64: 32, 128>}, {transform_indices = @transform_2, window_bounds = array<i64: 1, 128>}, {transform_indices = @transform_3, window_bounds = array<i64: 2, 128>}]} {
    %c0 = arith.constant 0 : index
    %c0_0 = arith.constant 0 : index
    %0 = vector.load %arg1[%c0, %c0_0] : memref<2x32xf32, #tpu.memory_space<vmem>>, vector<2x32xf32>
    %c0_1 = arith.constant 0 : index
    %c0_2 = arith.constant 0 : index
    %1 = vector.load %arg2[%c0_1, %c0_2] : memref<32x128xf32, #tpu.memory_space<vmem>>, vector<32x128xf32>
    %cst = arith.constant dense<0.000000e+00> : vector<2x128xf32>
    %2 = tpu.matmul %0, %1, %cst {dimension_numbers = #tpu.dot_dimension_numbers<[1], [0], [0], [1], [0, 0, 1, 1], [], []>} : vector<2x32xf32>, vector<32x128xf32>, vector<2x128xf32> -> vector<2x128xf32>
    %c0_3 = arith.constant 0 : index
    %c0_4 = arith.constant 0 : index
    %3 = vector.load %arg3[%c0_3, %c0_4] : memref<1x128xf32, #tpu.memory_space<vmem>>, vector<1x128xf32>
    %4 = vector.broadcast %3 : vector<1x128xf32> to vector<2x128xf32>
    %5 = arith.addf %2, %4 : vector<2x128xf32>
    %6 = math.tanh %5 : vector<2x128xf32>
    %c0_5 = arith.constant 0 : index
    %c0_6 = arith.constant 0 : index
    %7 = vector.load %arg4[%c0_5, %c0_6] : memref<2x128xf32, #tpu.memory_space<vmem>>, vector<2x128xf32>
    tpu.vector_store %arg4[%c0_5, %c0_6], %6 {strides = array<i32>} : memref<2x128xf32, #tpu.memory_space<vmem>>, vector<2x128xf32>,
    return
  }
  func.func @transform_0(%arg0: i32) -> (i32, i32) {
    %c0_i32 = arith.constant 0 : i32
    %c0_i32_0 = arith.constant 0 : i32
    %c0_i32_1 = arith.constant 0 : i32
    return %c0_i32, %c0_i32_0 : i32, i32
  }
  func.func @transform_1(%arg0: i32) -> (i32, i32) {
    %c0_i32 = arith.constant 0 : i32
    %c0_i32_0 = arith.constant 0 : i32
    return %c0_i32, %arg0 : i32, i32
  }
  func.func @transform_2(%arg0: i32) -> (i32, i32) {
    %c0_i32 = arith.constant 0 : i32
    %c0_i32_0 = arith.constant 0 : i32
    return %c0_i32, %arg0 : i32, i32
  }
  func.func @transform_3(%arg0: i32) -> (i32, i32) {
    %c0_i32 = arith.constant 0 : i32
    %c0_i32_0 = arith.constant 0 : i32
    return %c0_i32, %arg0 : i32, i32
  }
}

module attributes {stable_mosaic.version = 11 : i64} {
  func.func @bert_pool_kernel(%arg0: i32, %arg1: memref<2x32xf32, #tpu.memory_space<vmem>>, %arg2: memref<32x128xf32, #tpu.memory_space<vmem>>, %arg3: memref<1x128xf32, #tpu.memory_space<vmem>>, %arg4: memref<2x128xf32, #tpu.memory_space<vmem>>) attributes {dimension_semantics = [#tpu.dimension_semantics<parallel>], iteration_bounds = array<i64: 1>, scalar_prefetch = 0 : i64, scratch_operands = 0 : i64, tpu.core_type = #tpu.core_type<tc>, window_params = [{pipeline_mode = #tpu.pipeline_mode<synchronous>, transform_indices = @transform_0, window_bounds = array<i64: 2, 32>}, {transform_indices = @transform_1, window_bounds = array<i64: 32, 128>}, {transform_indices = @transform_2, window_bounds = array<i64: 1, 128>}, {transform_indices = @transform_3, window_bounds = array<i64: 2, 128>}]} {
    %c0 = arith.constant 0 : index
    %c0_0 = arith.constant 0 : index
    %0 = vector.load %arg1[%c0, %c0_0] : memref<2x32xf32, #tpu.memory_space<vmem>>, vector<2x32xf32>
    %c0_1 = arith.constant 0 : index
    %c0_2 = arith.constant 0 : index
    %1 = vector.load %arg2[%c0_1, %c0_2] : memref<32x128xf32, #tpu.memory_space<vmem>>, vector<32x128xf32>
    %cst = arith.constant dense<0.000000e+00> : vector<2x128xf32>
    %2 = tpu.matmul %0, %1, %cst {dimension_numbers = #tpu.dot_dimension_numbers<[1], [0], [0], [1], [0, 0, 1, 1], [], []>} : vector<2x32xf32>, vector<32x128xf32>, vector<2x128xf32> -> vector<2x128xf32>
    %c0_3 = arith.constant 0 : index
    %c0_4 = arith.constant 0 : index
    %3 = vector.load %arg3[%c0_3, %c0_4] : memref<1x128xf32, #tpu.memory_space<vmem>>, vector<1x128xf32>
    %4 = vector.broadcast %3 : vector<1x128xf32> to vector<2x128xf32>
    %5 = arith.addf %2, %4 : vector<2x128xf32>
    %6 = math.tanh %5 : vector<2x128xf32>
    %c0_5 = arith.constant 0 : index
    %c0_6 = arith.constant 0 : index
    %7 = vector.load %arg4[%c0_5, %c0_6] : memref<2x128xf32, #tpu.memory_space<vmem>>, vector<2x128xf32>
    tpu.vector_store %arg4[%c0_5, %c0_6], %6 {strides = array<i32>} : memref<2x128xf32, #tpu.memory_space<vmem>>, vector<2x128xf32>,
    return
  }
  func.func @transform_0(%arg0: i32) -> (i32, i32) {
    %c0_i32 = arith.constant 0 : i32
    %c0_i32_0 = arith.constant 0 : i32
    %c0_i32_1 = arith.constant 0 : i32
    return %c0_i32, %c0_i32_0 : i32, i32
  }
  func.func @transform_1(%arg0: i32) -> (i32, i32) {
    %c0_i32 = arith.constant 0 : i32
    %c0_i32_0 = arith.constant 0 : i32
    return %c0_i32, %arg0 : i32, i32
  }
  func.func @transform_2(%arg0: i32) -> (i32, i32) {
    %c0_i32 = arith.constant 0 : i32
    %c0_i32_0 = arith.constant 0 : i32
    return %c0_i32, %arg0 : i32, i32
  }
  func.func @transform_3(%arg0: i32) -> (i32, i32) {
    %c0_i32 = arith.constant 0 : i32
    %c0_i32_0 = arith.constant 0 : i32
    return %c0_i32, %arg0 : i32, i32
  }
}

module attributes {stable_mosaic.version = 11 : i64} {
  func.func @bert_pool_kernel(%arg0: i32, %arg1: memref<2x32xf32, #tpu.memory_space<vmem>>, %arg2: memref<32x128xf32, #tpu.memory_space<vmem>>, %arg3: memref<1x128xf32, #tpu.memory_space<vmem>>, %arg4: memref<2x128xf32, #tpu.memory_space<vmem>>) attributes {dimension_semantics = [#tpu.dimension_semantics<arbitrary>], iteration_bounds = array<i64: 1>, scalar_prefetch = 0 : i64, scratch_operands = 0 : i64, tpu.core_type = #tpu.core_type<tc>, window_params = [{pipeline_mode = #tpu.pipeline_mode<synchronous>, transform_indices = @transform_0, window_bounds = array<i64: 2, 32>}, {transform_indices = @transform_1, window_bounds = array<i64: 32, 128>}, {transform_indices = @transform_2, window_bounds = array<i64: 1, 128>}, {transform_indices = @transform_3, window_bounds = array<i64: 2, 128>}]} {
    %c0 = arith.constant 0 : index
    %c0_0 = arith.constant 0 : index
    %0 = vector.load %arg1[%c0, %c0_0] : memref<2x32xf32, #tpu.memory_space<vmem>>, vector<2x32xf32>
    %c0_1 = arith.constant 0 : index
    %c0_2 = arith.constant 0 : index
    %1 = vector.load %arg2[%c0_1, %c0_2] : memref<32x128xf32, #tpu.memory_space<vmem>>, vector<32x128xf32>
    %cst = arith.constant dense<0.000000e+00> : vector<2x128xf32>
    %2 = tpu.matmul %0, %1, %cst {dimension_numbers = #tpu.dot_dimension_numbers<[1], [0], [0], [1], [0, 0, 1, 1], [], []>} : vector<2x32xf32>, vector<32x128xf32>, vector<2x128xf32> -> vector<2x128xf32>
    %c0_3 = arith.constant 0 : index
    %c0_4 = arith.constant 0 : index
    %3 = vector.load %arg3[%c0_3, %c0_4] : memref<1x128xf32, #tpu.memory_space<vmem>>, vector<1x128xf32>
    %4 = vector.broadcast %3 : vector<1x128xf32> to vector<2x128xf32>
    %5 = arith.addf %2, %4 : vector<2x128xf32>
    %6 = math.tanh %5 : vector<2x128xf32>
    %c0_5 = arith.constant 0 : index
    %c0_6 = arith.constant 0 : index
    %7 = vector.load %arg4[%c0_5, %c0_6] : memref<2x128xf32, #tpu.memory_space<vmem>>, vector<2x128xf32>
    tpu.vector_store %arg4[%c0_5, %c0_6], %6 {strides = array<i32>} : memref<2x128xf32, #tpu.memory_space<vmem>>, vector<2x128xf32>,
    return
  }
  func.func @transform_0(%arg0: i32) -> (i32, i32) {
    %c0_i32 = arith.constant 0 : i32
    %c0_i32_0 = arith.constant 0 : i32
    %c0_i32_1 = arith.constant 0 : i32
    return %c0_i32, %c0_i32_0 : i32, i32
  }
  func.func @transform_1(%arg0: i32) -> (i32, i32) {
    %c0_i32 = arith.constant 0 : i32
    %c0_i32_0 = arith.constant 0 : i32
    return %c0_i32, %arg0 : i32, i32
  }
  func.func @transform_2(%arg0: i32) -> (i32, i32) {
    %c0_i32 = arith.constant 0 : i32
    %c0_i32_0 = arith.constant 0 : i32
    return %c0_i32, %arg0 : i32, i32
  }
  func.func @transform_3(%arg0: i32) -> (i32, i32) {
    %c0_i32 = arith.constant 0 : i32
    %c0_i32_0 = arith.constant 0 : i32
    return %c0_i32, %arg0 : i32, i32
  }
}

</mosaic_0001>

<llo_original>
// kernel: tpu_custom_call.1
$region0: #{tpu_custom_call.1}
  #allocation0 [shape = 'u32[]', space=smem, size = 0x4, offset = 0x4, fixed_abs, tag = 'smem constant byte address 0x4 - core index']
  #allocation1 [shape = 'u32[72,128]{1,0:T(1,128)}', space=vmem, size = 0x9000, scoped, tag = 'internal scratch']
  %s0 = inlined_call_operand.hbm [shape: f32[2,32], index: 0, kind: input, shape index: {}]
  %s1 = inlined_call_operand.hbm [shape: f32[32,128], index: 1, kind: input, shape index: {}]
  %s2 = inlined_call_operand.vmem [shape: f32[1,128], index: 2, kind: input, shape index: {}]
  %s3 = inlined_call_operand.hbm [shape: f32[2,128], index: 3, kind: output, shape index: {}]
  %s4 = sld [smem:[#allocation0]]
  $region30: #{tpu_custom_call.1} parent=0
    _
  %s6 = ssub.s32 1, %s4
  %s7 = scalar_select 0, %s6, %s4
  $region1: #{tpu_custom_call.1} parent=0
    #allocation2 [shape = 'u8[1024]{0}', space=vmem, size = 0x400, scoped, tag = 'input window, operand 0, single buffered']
    #allocation3 [shape = 's32[1]{0}', space=sflag, size = 0x4, scoped, tag = 'scoped memory for tpu_custom_call.1']
    #allocation4 [shape = 's32[1]{0}', space=sflag, size = 0x4, scoped, tag = 'scoped memory for tpu_custom_call.1']
    #allocation5 [shape = 'u8[16384]{0}', space=vmem, size = 0x4000, scoped, tag = 'input window, operand 1, single buffered']
    #allocation6 [shape = 's32[1]{0}', space=sflag, size = 0x4, scoped, tag = 'scoped memory for tpu_custom_call.1']
    #allocation7 [shape = 'u8[1024]{0}', space=vmem, size = 0x400, scoped, tag = 'output window, operand 0, single buffered']
    %8 = vsyncpa [#allocation3], 0
    %9 = vsyncpa [#allocation6], 0
    %10 = vsyncpa [#allocation4], 0
    // Predicated region
    $region2: #{tpu_custom_call.1} parent=1 // pred_check
      _
    $region3: #{tpu_custom_call.1} parent=1 // pred_check_branch
      %12 = sbr.rel (0) target = $region5
    $region4: #{tpu_custom_call.1} parent=1 // pred_region
      %14 = vsyncadd [#allocation3], 0
      %s16 = sshll.u32 %s0, 4
      %s17 = int_to_ptr.hbm [resolvable:$true] %s16
      %s18 = sshll.u32 [#allocation2], 4
      %s19 = int_to_ptr.vmem [resolvable:$true] %s18
      %21 = dma.hbm_to_vmem [thread:$0]  %s17, 32, %s19, [#allocation3]
    $region5: #{tpu_custom_call.1} parent=1 // pred_fallthru
      _
    // Predicated region
    $region6: #{tpu_custom_call.1} parent=1 // pred_check
      _
    $region7: #{tpu_custom_call.1} parent=1 // pred_check_branch
      %23 = sbr.rel (0) target = $region9
    $region8: #{tpu_custom_call.1} parent=1 // pred_region
      %25 = vsyncadd [#allocation6], 0
      %s26 = smul.addr %s7, 8
      %s27 = scalar_lea.hbm %s1, %s26
      %s28 = sshll.u32 %s27, 4
      %s29 = int_to_ptr.hbm [resolvable:$true] %s28
      %s30 = sshll.u32 [#allocation5], 4
      %s31 = int_to_ptr.vmem [resolvable:$true] %s30
      %36 = dma.hbm_to_vmem [thread:$0]  %s29, 512, %s31, [#allocation6], 128, 128, 8
    $region9: #{tpu_custom_call.1} parent=1 // pred_fallthru
      _
    // Predicated region
    $region10: #{tpu_custom_call.1} parent=1 // pred_check
      _
    $region11: #{tpu_custom_call.1} parent=1 // pred_check_branch
      %38 = sbr.rel (0) target = $region13
    $region12: #{tpu_custom_call.1} parent=1 // pred_region
      %p39 = scmp.lt.s32.totalorder %s7, 0
      %s40 = scalar_select %p39, %s7, 0
      %s41 = scalar_lea.vmem %s2, %s40
    $region13: #{tpu_custom_call.1} parent=1 // pred_fallthru
      _
    // Predicated region
    $region14: #{tpu_custom_call.1} parent=1 // pred_check
      _
    $region15: #{tpu_custom_call.1} parent=1 // pred_check_branch
      %43 = sbr.rel (0) target = $region17
    $region16: #{tpu_custom_call.1} parent=1 // pred_region
      %45 = dma.done [#allocation3], 32
    $region17: #{tpu_custom_call.1} parent=1 // pred_fallthru
      _
    // Predicated region
    $region18: #{tpu_custom_call.1} parent=1 // pred_check
      _
    $region19: #{tpu_custom_call.1} parent=1 // pred_check_branch
      %47 = sbr.rel (0) target = $region21
    $region20: #{tpu_custom_call.1} parent=1 // pred_region
      %49 = dma.done [#allocation6], 512
    $region21: #{tpu_custom_call.1} parent=1 // pred_fallthru
      _
    %p50 = scmp.lt.s32.totalorder %s7, 0
    %s51 = scalar_select %p50, %s7, 0
    %s52 = scalar_lea.vmem %s2, %s51
    %p53 = scmp.lt.s32.totalorder %s7, 0
    %s54 = scalar_select %p53, %s7, 0
    %s55 = scalar_lea.vmem %s2, %s54
    %v56 = vld [vmem:[#allocation2] sm:$0x3]
    %v57 = vld [vmem:[#allocation5] sm:$0xff]
    %v58 = vld [vmem:[#allocation5 + $0x8] sm:$0xff]
    %v59 = vld [vmem:[#allocation5 + $0x10] sm:$0xff]
    %v60 = vld [vmem:[#allocation5 + $0x18] sm:$0xff]
    %v61 = vld [vmem:[%s55] sm:$0x1]
    %v63 = vperm.slane %v61, 0
    %vm65 = vcmask 261120
    %v67 = vsel %vm65, %v56, 0
    %69 = vmatpush.msra.mxu0 0.0
    %70 = vmatpush.msra.mxu0 0.0
    %71 = vmatpush.msra.mxu0 0.0
    %72 = vmatpush.msra.mxu0 0.0
    %73 = vmatpush.msra.mxu0 0.0
    %74 = vmatpush.msra.mxu0 0.0
    %75 = vmatpush.msra.mxu0 0.0
    %76 = vmatpush.msra.mxu0 0.0
    %77 = vmatpush.msra.mxu0 0.0
    %78 = vmatpush.msra.mxu0 0.0
    %79 = vmatpush.msra.mxu0 0.0
    %80 = vmatpush.msra.mxu0 0.0
    %81 = vmatpush.msra.mxu0 %v60
    %82 = vmatpush.msra.mxu0 %v59
    %83 = vmatpush.msra.mxu0 %v58
    %84 = vmatpush.msra.mxu0 %v57
    %85 = vmatmul.f32.gmra.mxu0 %v67
    %v86 = vpop.f32.mrf.mxu0
    %v87 = vadd.f32 %v63, %v86
    %88 = vdwg.mxu0
    %v89 = vtanh.pop %v87
    %90 = vst [vmem:[#allocation7] sm:$0x3] %v89
    // Predicated region
    $region22: #{tpu_custom_call.1} parent=1 // pred_check
      _
    $region23: #{tpu_custom_call.1} parent=1 // pred_check_branch
      %92 = sbr.rel (0) target = $region25
    $region24: #{tpu_custom_call.1} parent=1 // pred_region
      %94 = vsyncadd [#allocation4], 0
      %s95 = smul.addr %s7, 2
      %s96 = scalar_lea.hbm %s3, %s95
      %s98 = sshll.u32 [#allocation7], 4
      %s99 = int_to_ptr.vmem [resolvable:$true] %s98
      %s100 = sshll.u32 %s96, 4
      %s101 = int_to_ptr.hbm [resolvable:$true] %s100
      %103 = dma.vmem_to_hbm [thread:$0]  %s99, 32, %s101, [#allocation4]
    $region25: #{tpu_custom_call.1} parent=1 // pred_fallthru
      _
    // Predicated region
    $region26: #{tpu_custom_call.1} parent=1 // pred_check
      _
    $region27: #{tpu_custom_call.1} parent=1 // pred_check_branch
      %105 = sbr.rel (0) target = $region29
    $region28: #{tpu_custom_call.1} parent=1 // pred_region
      %107 = dma.done [#allocation4], 32
    $region29: #{tpu_custom_call.1} parent=1 // pred_fallthru
      _
    %108 = vsyncpa [#allocation3], 1
    %109 = vsyncpa [#allocation6], 1
    %110 = vsyncpa [#allocation4], 1

// kernel: tpu_custom_call.1
$region0: #{tpu_custom_call.1}
  #allocation0 [shape = 'u32[]', space=smem, size = 0x4, offset = 0x4, fixed_abs, tag = 'smem constant byte address 0x4 - core index']
  #allocation1 [shape = 'u32[72,128]{1,0:T(1,128)}', space=vmem, size = 0x9000, scoped, tag = 'internal scratch']
  %s0 = inlined_call_operand.hbm [shape: f32[2,32], index: 0, kind: input, shape index: {}]
  %s1 = inlined_call_operand.hbm [shape: f32[32,128], index: 1, kind: input, shape index: {}]
  %s2 = inlined_call_operand.vmem [shape: f32[1,128], index: 2, kind: input, shape index: {}]
  %s3 = inlined_call_operand.hbm [shape: f32[2,128], index: 3, kind: output, shape index: {}]
  %s4 = sld [smem:[#allocation0]]
  $region30: #{tpu_custom_call.1} parent=0
    _
  %s6 = ssub.s32 1, %s4
  %s7 = scalar_select 0, %s6, %s4
  $region1: #{tpu_custom_call.1} parent=0
    #allocation2 [shape = 'u8[1024]{0}', space=vmem, size = 0x400, scoped, tag = 'input window, operand 0, single buffered']
    #allocation3 [shape = 's32[1]{0}', space=sflag, size = 0x4, scoped, tag = 'scoped memory for tpu_custom_call.1']
    #allocation4 [shape = 's32[1]{0}', space=sflag, size = 0x4, scoped, tag = 'scoped memory for tpu_custom_call.1']
    #allocation5 [shape = 'u8[16384]{0}', space=vmem, size = 0x4000, scoped, tag = 'input window, operand 1, single buffered']
    #allocation6 [shape = 's32[1]{0}', space=sflag, size = 0x4, scoped, tag = 'scoped memory for tpu_custom_call.1']
    #allocation7 [shape = 'u8[1024]{0}', space=vmem, size = 0x400, scoped, tag = 'output window, operand 0, single buffered']
    %8 = vsyncpa [#allocation3], 0
    %9 = vsyncpa [#allocation6], 0
    %10 = vsyncpa [#allocation4], 0
    // Predicated region
    $region2: #{tpu_custom_call.1} parent=1 // pred_check
      _
    $region3: #{tpu_custom_call.1} parent=1 // pred_check_branch
      %12 = sbr.rel (0) target = $region5
    $region4: #{tpu_custom_call.1} parent=1 // pred_region
      %14 = vsyncadd [#allocation3], 0
      %s16 = sshll.u32 %s0, 4
      %s17 = int_to_ptr.hbm [resolvable:$true] %s16
      %s18 = sshll.u32 [#allocation2], 4
      %s19 = int_to_ptr.vmem [resolvable:$true] %s18
      %21 = dma.hbm_to_vmem [thread:$0]  %s17, 32, %s19, [#allocation3]
    $region5: #{tpu_custom_call.1} parent=1 // pred_fallthru
      _
    // Predicated region
    $region6: #{tpu_custom_call.1} parent=1 // pred_check
      _
    $region7: #{tpu_custom_call.1} parent=1 // pred_check_branch
      %23 = sbr.rel (0) target = $region9
    $region8: #{tpu_custom_call.1} parent=1 // pred_region
      %25 = vsyncadd [#allocation6], 0
      %s26 = sshll.u32 %s1, 4
      %s27 = int_to_ptr.hbm [resolvable:$true] %s26
      %s28 = sshll.u32 [#allocation5], 4
      %s29 = int_to_ptr.vmem [resolvable:$true] %s28
      %34 = dma.hbm_to_vmem [thread:$0]  %s27, 512, %s29, [#allocation6], 128, 128, 8
    $region9: #{tpu_custom_call.1} parent=1 // pred_fallthru
      _
    // Predicated region
    $region10: #{tpu_custom_call.1} parent=1 // pred_check
      _
    $region11: #{tpu_custom_call.1} parent=1 // pred_check_branch
      %36 = sbr.rel (0) target = $region13
    $region12: #{tpu_custom_call.1} parent=1 // pred_region
      _
    $region13: #{tpu_custom_call.1} parent=1 // pred_fallthru
      _
    // Predicated region
    $region14: #{tpu_custom_call.1} parent=1 // pred_check
      _
    $region15: #{tpu_custom_call.1} parent=1 // pred_check_branch
      %38 = sbr.rel (0) target = $region17
    $region16: #{tpu_custom_call.1} parent=1 // pred_region
      %40 = dma.done [#allocation3], 32
    $region17: #{tpu_custom_call.1} parent=1 // pred_fallthru
      _
    // Predicated region
    $region18: #{tpu_custom_call.1} parent=1 // pred_check
      _
    $region19: #{tpu_custom_call.1} parent=1 // pred_check_branch
      %42 = sbr.rel (0) target = $region21
    $region20: #{tpu_custom_call.1} parent=1 // pred_region
      %44 = dma.done [#allocation6], 512
    $region21: #{tpu_custom_call.1} parent=1 // pred_fallthru
      _
    %v45 = vld [vmem:[#allocation2] sm:$0x3]
    %v46 = vld [vmem:[#allocation5] sm:$0xff]
    %v47 = vld [vmem:[#allocation5 + $0x8] sm:$0xff]
    %v48 = vld [vmem:[#allocation5 + $0x10] sm:$0xff]
    %v49 = vld [vmem:[#allocation5 + $0x18] sm:$0xff]
    %v50 = vld [vmem:[%s2] sm:$0x1]
    %v52 = vperm.slane %v50, 0
    %vm54 = vcmask 261120
    %v56 = vsel %vm54, %v45, 0
    %58 = vmatpush.msra.mxu0 0.0
    %59 = vmatpush.msra.mxu0 0.0
    %60 = vmatpush.msra.mxu0 0.0
    %61 = vmatpush.msra.mxu0 0.0
    %62 = vmatpush.msra.mxu0 0.0
    %63 = vmatpush.msra.mxu0 0.0
    %64 = vmatpush.msra.mxu0 0.0
    %65 = vmatpush.msra.mxu0 0.0
    %66 = vmatpush.msra.mxu0 0.0
    %67 = vmatpush.msra.mxu0 0.0
    %68 = vmatpush.msra.mxu0 0.0
    %69 = vmatpush.msra.mxu0 0.0
    %70 = vmatpush.msra.mxu0 %v49
    %71 = vmatpush.msra.mxu0 %v48
    %72 = vmatpush.msra.mxu0 %v47
    %73 = vmatpush.msra.mxu0 %v46
    %74 = vmatmul.f32.gmra.mxu0 %v56
    %v75 = vpop.f32.mrf.mxu0
    %v76 = vadd.f32 %v52, %v75
    %77 = vdwg.mxu0
    %v78 = vtanh.pop %v76
    %79 = vst [vmem:[#allocation7] sm:$0x3] %v78
    // Predicated region
    $region22: #{tpu_custom_call.1} parent=1 // pred_check
      _
    $region23: #{tpu_custom_call.1} parent=1 // pred_check_branch
      %81 = sbr.rel (0) target = $region25
    $region24: #{tpu_custom_call.1} parent=1 // pred_region
      %83 = vsyncadd [#allocation4], 0
      %s85 = sshll.u32 [#allocation7], 4
      %s86 = int_to_ptr.vmem [resolvable:$true] %s85
      %s87 = sshll.u32 %s3, 4
      %s88 = int_to_ptr.hbm [resolvable:$true] %s87
      %90 = dma.vmem_to_hbm [thread:$0]  %s86, 32, %s88, [#allocation4]
    $region25: #{tpu_custom_call.1} parent=1 // pred_fallthru
      _
    // Predicated region
    $region26: #{tpu_custom_call.1} parent=1 // pred_check
      _
    $region27: #{tpu_custom_call.1} parent=1 // pred_check_branch
      %92 = sbr.rel (0) target = $region29
    $region28: #{tpu_custom_call.1} parent=1 // pred_region
      %94 = dma.done [#allocation4], 32
    $region29: #{tpu_custom_call.1} parent=1 // pred_fallthru
      _
    %95 = vsyncpa [#allocation3], 1
    %96 = vsyncpa [#allocation6], 1
    %97 = vsyncpa [#allocation4], 1

// kernel: tpu_custom_call.1
$region0: #{tpu_custom_call.1}
  #allocation0 [shape = 'u32[]', space=smem, size = 0x4, offset = 0x4, fixed_abs, tag = 'smem constant byte address 0x4 - core index']
  #allocation1 [shape = 'u32[72,128]{1,0:T(1,128)}', space=vmem, size = 0x9000, scoped, tag = 'internal scratch']
  %s0 = inlined_call_operand.hbm [shape: f32[2,32], index: 0, kind: input, shape index: {}]
  %s1 = inlined_call_operand.hbm [shape: f32[32,128], index: 1, kind: input, shape index: {}]
  %s2 = inlined_call_operand.vmem [shape: f32[1,128], index: 2, kind: input, shape index: {}]
  %s3 = inlined_call_operand.hbm [shape: f32[2,128], index: 3, kind: output, shape index: {}]
  %s4 = sld [smem:[#allocation0]]
  $region30: #{tpu_custom_call.1} parent=0
    _
  %s6 = ssub.s32 1, %s4
  %s7 = scalar_select 0, %s6, %s4
  $region1: #{tpu_custom_call.1} parent=0
    #allocation2 [shape = 'u8[1024]{0}', space=vmem, size = 0x400, scoped, tag = 'input window, operand 0, single buffered']
    #allocation3 [shape = 's32[1]{0}', space=sflag, size = 0x4, scoped, tag = 'scoped memory for tpu_custom_call.1']
    #allocation4 [shape = 's32[1]{0}', space=sflag, size = 0x4, scoped, tag = 'scoped memory for tpu_custom_call.1']
    #allocation5 [shape = 'u8[16384]{0}', space=vmem, size = 0x4000, scoped, tag = 'input window, operand 1, single buffered']
    #allocation6 [shape = 's32[1]{0}', space=sflag, size = 0x4, scoped, tag = 'scoped memory for tpu_custom_call.1']
    #allocation7 [shape = 'u8[1024]{0}', space=vmem, size = 0x400, scoped, tag = 'output window, operand 0, single buffered']
    %8 = vsyncpa [#allocation3], 0
    %9 = vsyncpa [#allocation6], 0
    %10 = vsyncpa [#allocation4], 0
    // Predicated region
    $region2: #{tpu_custom_call.1} parent=1 // pred_check
      _
    $region3: #{tpu_custom_call.1} parent=1 // pred_check_branch
      %12 = sbr.rel (0) target = $region5
    $region4: #{tpu_custom_call.1} parent=1 // pred_region
      %14 = vsyncadd [#allocation3], 0
      %s16 = sshll.u32 %s0, 4
      %s17 = int_to_ptr.hbm [resolvable:$true] %s16
      %s18 = sshll.u32 [#allocation2], 4
      %s19 = int_to_ptr.vmem [resolvable:$true] %s18
      %21 = dma.hbm_to_vmem [thread:$0]  %s17, 32, %s19, [#allocation3]
    $region5: #{tpu_custom_call.1} parent=1 // pred_fallthru
      _
    // Predicated region
    $region6: #{tpu_custom_call.1} parent=1 // pred_check
      _
    $region7: #{tpu_custom_call.1} parent=1 // pred_check_branch
      %23 = sbr.rel (0) target = $region9
    $region8: #{tpu_custom_call.1} parent=1 // pred_region
      %25 = vsyncadd [#allocation6], 0
      %s26 = sshll.u32 %s1, 4
      %s27 = int_to_ptr.hbm [resolvable:$true] %s26
      %s28 = sshll.u32 [#allocation5], 4
      %s29 = int_to_ptr.vmem [resolvable:$true] %s28
      %34 = dma.hbm_to_vmem [thread:$0]  %s27, 512, %s29, [#allocation6], 128, 128, 8
    $region9: #{tpu_custom_call.1} parent=1 // pred_fallthru
      _
    // Predicated region
    $region10: #{tpu_custom_call.1} parent=1 // pred_check
      _
    $region11: #{tpu_custom_call.1} parent=1 // pred_check_branch
      %36 = sbr.rel (0) target = $region13
    $region12: #{tpu_custom_call.1} parent=1 // pred_region
      _
    $region13: #{tpu_custom_call.1} parent=1 // pred_fallthru
      _
    // Predicated region
    $region14: #{tpu_custom_call.1} parent=1 // pred_check
      _
    $region15: #{tpu_custom_call.1} parent=1 // pred_check_branch
      %38 = sbr.rel (0) target = $region17
    $region16: #{tpu_custom_call.1} parent=1 // pred_region
      %40 = dma.done [#allocation3], 32
    $region17: #{tpu_custom_call.1} parent=1 // pred_fallthru
      _
    // Predicated region
    $region18: #{tpu_custom_call.1} parent=1 // pred_check
      _
    $region19: #{tpu_custom_call.1} parent=1 // pred_check_branch
      %42 = sbr.rel (0) target = $region21
    $region20: #{tpu_custom_call.1} parent=1 // pred_region
      %44 = dma.done [#allocation6], 512
    $region21: #{tpu_custom_call.1} parent=1 // pred_fallthru
      _
    %v45 = vld [vmem:[#allocation2] sm:$0x3]
    %v46 = vld [vmem:[#allocation5] sm:$0xff]
    %v47 = vld [vmem:[#allocation5 + $0x8] sm:$0xff]
    %v48 = vld [vmem:[#allocation5 + $0x10] sm:$0xff]
    %v49 = vld [vmem:[#allocation5 + $0x18] sm:$0xff]
    %v50 = vld [vmem:[%s2] sm:$0x1]
    %v52 = vperm.slane %v50, 0
    %vm54 = vcmask 261120
    %v56 = vsel %vm54, %v45, 0
    %58 = vmatpush.msra.mxu0 0.0
    %59 = vmatpush.msra.mxu0 0.0
    %60 = vmatpush.msra.mxu0 0.0
    %61 = vmatpush.msra.mxu0 0.0
    %62 = vmatpush.msra.mxu0 0.0
    %63 = vmatpush.msra.mxu0 0.0
    %64 = vmatpush.msra.mxu0 0.0
    %65 = vmatpush.msra.mxu0 0.0
    %66 = vmatpush.msra.mxu0 0.0
    %67 = vmatpush.msra.mxu0 0.0
    %68 = vmatpush.msra.mxu0 0.0
    %69 = vmatpush.msra.mxu0 0.0
    %70 = vmatpush.msra.mxu0 %v49
    %71 = vmatpush.msra.mxu0 %v48
    %72 = vmatpush.msra.mxu0 %v47
    %73 = vmatpush.msra.mxu0 %v46
    %74 = vmatmul.f32.gmra.mxu0 %v56
    %v75 = vpop.f32.mrf.mxu0
    %v76 = vadd.f32 %v52, %v75
    %77 = vdwg.mxu0
    %v78 = vtanh.pop %v76
    %79 = vst [vmem:[#allocation7] sm:$0x3] %v78
    // Predicated region
    $region22: #{tpu_custom_call.1} parent=1 // pred_check
      _
    $region23: #{tpu_custom_call.1} parent=1 // pred_check_branch
      %81 = sbr.rel (0) target = $region25
    $region24: #{tpu_custom_call.1} parent=1 // pred_region
      %83 = vsyncadd [#allocation4], 0
      %s85 = sshll.u32 [#allocation7], 4
      %s86 = int_to_ptr.vmem [resolvable:$true] %s85
      %s87 = sshll.u32 %s3, 4
      %s88 = int_to_ptr.hbm [resolvable:$true] %s87
      %90 = dma.vmem_to_hbm [thread:$0]  %s86, 32, %s88, [#allocation4]
    $region25: #{tpu_custom_call.1} parent=1 // pred_fallthru
      _
    // Predicated region
    $region26: #{tpu_custom_call.1} parent=1 // pred_check
      _
    $region27: #{tpu_custom_call.1} parent=1 // pred_check_branch
      %92 = sbr.rel (0) target = $region29
    $region28: #{tpu_custom_call.1} parent=1 // pred_region
      %94 = dma.done [#allocation4], 32
    $region29: #{tpu_custom_call.1} parent=1 // pred_fallthru
      _
    %95 = vsyncpa [#allocation3], 1
    %96 = vsyncpa [#allocation6], 1
    %97 = vsyncpa [#allocation4], 1

</llo_original>
